<compile_context>
chip_gen: v7x
topology: tpu7x:2x2x1
jax: 0.10.0
libtpu: 0.0.40
codegen_flags: <defaults>
</compile_context>

<pallas_src>
import jax
import jax.numpy as jnp
from jax.experimental import pallas as pl
from jax.experimental.pallas import tpu as pltpu

IN_FEATURES = 5
OUT_FEATURES = 8


def _linear_hardish_kernel(x_ref, w_ref, b_ref, o_ref):
    # x_ref: (IN,)      f32 in SMEM  (cheap scalar reads)
    # w_ref: (IN, OUT)  f32 in VMEM
    # b_ref: (1, OUT)   f32 in VMEM
    # o_ref: (1, OUT)   f32 in VMEM
    k_dim = w_ref.shape[0]
    # y1 = b + sum_k x[k] * w[k, :]   (unrolled scalar-broadcast FMA on the VPU)
    acc = b_ref[...] + x_ref[0] * w_ref[0:1, :]
    for k in range(1, k_dim):
        acc = acc + x_ref[k] * w_ref[k:k + 1, :]
    # (y1 * clip(y1, 0, 6) + 3) / 6  ==  y1 * clip(y1, 0, 6) * (1/6) + 0.5
    y = acc * jnp.clip(acc, 0.0, 6.0) * (1.0 / 6.0) + 0.5
    o_ref[...] = y.astype(o_ref.dtype)


def model_forward(x, w, b):
    """x: (1, 5) f32; w: (5, 8) f32 (transposed from torch's (8, 5)); b: (8,) f32."""
    B, in_f = x.shape
    assert B == 1, "kernel is specialized to the module's batch=1 input"
    out_f = w.shape[1]
    # Metadata-only reshapes (no copies): flat x for SMEM, bias as a (1, OUT) row.
    x_flat = x.reshape(in_f)
    b_row = b.reshape(1, out_f)
    return pl.pallas_call(
        _linear_hardish_kernel,
        out_shape=jax.ShapeDtypeStruct((B, out_f), jnp.float32),
        in_specs=[
            pl.BlockSpec(memory_space=pltpu.MemorySpace.SMEM),  # x scalars
            pl.BlockSpec(memory_space=pltpu.MemorySpace.VMEM),  # weight rows
            pl.BlockSpec(memory_space=pltpu.MemorySpace.VMEM),  # bias row
        ],
        out_specs=pl.BlockSpec(memory_space=pltpu.MemorySpace.VMEM),
    )(x_flat, w, b_row)


if __name__ == "__main__":
    key = jax.random.PRNGKey(0)
    kx, kw, kb = jax.random.split(key, 3)

    B, IN, OUT = 1, IN_FEATURES, OUT_FEATURES
    # deterministic example input, matching torch.randn(1, 5)
    x = jax.random.normal(kx, (B, IN), dtype=jnp.float32)

    # deterministic Linear(5, 8) params (torch stores weight as (OUT, IN); we keep (IN, OUT))
    bound = 1.0 / jnp.sqrt(IN)
    w = jax.random.uniform(kw, (IN, OUT), minval=-bound, maxval=bound, dtype=jnp.float32)
    b = jax.random.uniform(kb, (OUT,), minval=-bound, maxval=bound, dtype=jnp.float32)

    out = model_forward(x, w, b)
    jax.block_until_ready(out)

    # sanity check against pure-JAX reference of the original module
    y1 = x @ w + b
    ref = (y1 * jnp.clip(y1, 0.0, 6.0) + 3.0) / 6.0
    assert jnp.allclose(out, ref, atol=1e-5, rtol=1e-5), (out, ref)

    print("KERNEL_OK")
</pallas_src>

<mosaic_0001>
module attributes {stable_mosaic.version = 11 : i64} {
  func.func @_linear_hardish_kernel(%arg0: memref<5xf32, #tpu.memory_space<smem>>, %arg1: memref<5x8xf32, #tpu.memory_space<vmem>>, %arg2: memref<1x8xf32, #tpu.memory_space<vmem>>, %arg3: memref<1x8xf32, #tpu.memory_space<vmem>>) attributes {dimension_semantics = [], scalar_prefetch = 0 : i64, scratch_operands = 0 : i64, tpu.core_type = #tpu.core_type<tc>} {
    %c0 = arith.constant 0 : index
    %c0_0 = arith.constant 0 : index
    %0 = vector.load %arg2[%c0, %c0_0] : memref<1x8xf32, #tpu.memory_space<vmem>>, vector<1x8xf32>
    %c0_1 = arith.constant 0 : index
    %1 = memref.load %arg0[%c0_1] : memref<5xf32, #tpu.memory_space<smem>>
    %c0_2 = arith.constant 0 : index
    %c0_3 = arith.constant 0 : index
    %2 = vector.load %arg1[%c0_2, %c0_3] : memref<5x8xf32, #tpu.memory_space<vmem>>, vector<1x8xf32>
    %3 = vector.broadcast %1 : f32 to vector<1x8xf32>
    %4 = arith.mulf %3, %2 : vector<1x8xf32>
    %5 = arith.addf %0, %4 : vector<1x8xf32>
    %c1 = arith.constant 1 : index
    %6 = memref.load %arg0[%c1] : memref<5xf32, #tpu.memory_space<smem>>
    %c1_4 = arith.constant 1 : index
    %c0_5 = arith.constant 0 : index
    %7 = vector.load %arg1[%c1_4, %c0_5] : memref<5x8xf32, #tpu.memory_space<vmem>>, vector<1x8xf32>
    %8 = vector.broadcast %6 : f32 to vector<1x8xf32>
    %9 = arith.mulf %8, %7 : vector<1x8xf32>
    %10 = arith.addf %5, %9 : vector<1x8xf32>
    %c2 = arith.constant 2 : index
    %11 = memref.load %arg0[%c2] : memref<5xf32, #tpu.memory_space<smem>>
    %c2_6 = arith.constant 2 : index
    %c0_7 = arith.constant 0 : index
    %12 = vector.load %arg1[%c2_6, %c0_7] : memref<5x8xf32, #tpu.memory_space<vmem>>, vector<1x8xf32>
    %13 = vector.broadcast %11 : f32 to vector<1x8xf32>
    %14 = arith.mulf %13, %12 : vector<1x8xf32>
    %15 = arith.addf %10, %14 : vector<1x8xf32>
    %c3 = arith.constant 3 : index
    %16 = memref.load %arg0[%c3] : memref<5xf32, #tpu.memory_space<smem>>
    %c3_8 = arith.constant 3 : index
    %c0_9 = arith.constant 0 : index
    %17 = vector.load %arg1[%c3_8, %c0_9] : memref<5x8xf32, #tpu.memory_space<vmem>>, vector<1x8xf32>
    %18 = vector.broadcast %16 : f32 to vector<1x8xf32>
    %19 = arith.mulf %18, %17 : vector<1x8xf32>
    %20 = arith.addf %15, %19 : vector<1x8xf32>
    %c4 = arith.constant 4 : index
    %21 = memref.load %arg0[%c4] : memref<5xf32, #tpu.memory_space<smem>>
    %c4_10 = arith.constant 4 : index
    %c0_11 = arith.constant 0 : index
    %22 = vector.load %arg1[%c4_10, %c0_11] : memref<5x8xf32, #tpu.memory_space<vmem>>, vector<1x8xf32>
    %23 = vector.broadcast %21 : f32 to vector<1x8xf32>
    %24 = arith.mulf %23, %22 : vector<1x8xf32>
    %25 = arith.addf %20, %24 : vector<1x8xf32>
    %cst = arith.constant 0.000000e+00 : f32
    %cst_12 = arith.constant 6.000000e+00 : f32
    %26 = vector.broadcast %cst : f32 to vector<1x8xf32>
    %27 = arith.maximumf %26, %25 : vector<1x8xf32>
    %28 = vector.broadcast %cst_12 : f32 to vector<1x8xf32>
    %29 = arith.minimumf %28, %27 : vector<1x8xf32>
    %30 = arith.mulf %25, %29 : vector<1x8xf32>
    %cst_13 = arith.constant 0.166666672 : f32
    %31 = vector.broadcast %cst_13 : f32 to vector<1x8xf32>
    %32 = arith.mulf %30, %31 : vector<1x8xf32>
    %cst_14 = arith.constant 5.000000e-01 : f32
    %33 = vector.broadcast %cst_14 : f32 to vector<1x8xf32>
    %34 = arith.addf %32, %33 : vector<1x8xf32>
    %c0_15 = arith.constant 0 : index
    %c0_16 = arith.constant 0 : index
    %35 = vector.load %arg3[%c0_15, %c0_16] : memref<1x8xf32, #tpu.memory_space<vmem>>, vector<1x8xf32>
    tpu.vector_store %arg3[%c0_15, %c0_16], %34 {strides = array<i32>} : memref<1x8xf32, #tpu.memory_space<vmem>>, vector<1x8xf32>,
    return
  }
}

</mosaic_0001>

<llo_original>
// kernel: tpu_custom_call.1
$region0: #{tpu_custom_call.1}
  #allocation0 [shape = 'u32[]', space=smem, size = 0x4, offset = 0x4, fixed_abs, tag = 'smem constant byte address 0x4 - core index']
  #allocation1 [shape = 'u32[144,128]{1,0:T(1,128)}', space=vmem, size = 0x12000, scoped, tag = 'internal scratch']
  %s0 = inlined_call_operand.hbm [shape: f32[5], index: 0, kind: input, shape index: {}]
  %s1 = inlined_call_operand.hbm [shape: f32[5,8], index: 1, kind: input, shape index: {}]
  %s2 = inlined_call_operand.vmem [shape: f32[1,8], index: 2, kind: input, shape index: {}]
  %s3 = inlined_call_operand.hbm [shape: f32[1,8], index: 3, kind: output, shape index: {}]
  %s4 = sld [smem:[#allocation0]]
  $region30: #{tpu_custom_call.1} parent=0
    _
  %s6 = ssub.s32 1, %s4
  %s7 = scalar_select 0, %s6, %s4
  $region1: #{tpu_custom_call.1} parent=0
    #allocation2 [shape = 'u8[512]{0}', space=smem, size = 0x200, scoped, tag = 'input window, operand 0, single buffered']
    #allocation3 [shape = 's32[1]{0}', space=sflag, size = 0x4, scoped, tag = 'scoped memory for tpu_custom_call.1']
    #allocation4 [shape = 's32[1]{0}', space=sflag, size = 0x4, scoped, tag = 'scoped memory for tpu_custom_call.1']
    #allocation5 [shape = 's32[1]{0}', space=sflag, size = 0x4, scoped, tag = 'scoped memory for tpu_custom_call.1']
    #allocation6 [shape = 'u8[4096]{0}', space=vmem, size = 0x1000, scoped, tag = 'input window, operand 1, single buffered']
    #allocation7 [shape = 'u8[512]{0}', space=vmem, size = 0x400, scoped, tag = 'output window, operand 0, single buffered']
    %8 = vsyncpa [#allocation5], 0
    %9 = vsyncpa [#allocation3], 0
    %10 = vsyncpa [#allocation4], 0
    // Predicated region
    $region2: #{tpu_custom_call.1} parent=1 // pred_check
      _
    $region3: #{tpu_custom_call.1} parent=1 // pred_check_branch
      %12 = sbr.rel (0) target = $region5
    $region4: #{tpu_custom_call.1} parent=1 // pred_region
      %s14 = ssub.s32 16, 16
      %15 = vsyncadd [#allocation5], %s14
      %18 = dma.hbm_to_smem %s0, 16, [#allocation2], [#allocation5]
    $region5: #{tpu_custom_call.1} parent=1 // pred_fallthru
      _
    // Predicated region
    $region6: #{tpu_custom_call.1} parent=1 // pred_check
      _
    $region7: #{tpu_custom_call.1} parent=1 // pred_check_branch
      %20 = sbr.rel (0) target = $region9
    $region8: #{tpu_custom_call.1} parent=1 // pred_region
      %s22 = ssub.s32 128, 128
      %23 = vsyncadd [#allocation3], %s22
      %s25 = sshll.u32 [#allocation6], 4
      %s26 = int_to_ptr.vmem [resolvable:$true] %s25
      %28 = dma.hbm_to_vmem [thread:$0]  %s1, 128, %s26, [#allocation3]
    $region9: #{tpu_custom_call.1} parent=1 // pred_fallthru
      _
    // Predicated region
    $region10: #{tpu_custom_call.1} parent=1 // pred_check
      _
    $region11: #{tpu_custom_call.1} parent=1 // pred_check_branch
      %30 = sbr.rel (0) target = $region13
    $region12: #{tpu_custom_call.1} parent=1 // pred_region
      _
    $region13: #{tpu_custom_call.1} parent=1 // pred_fallthru
      _
    // Predicated region
    $region14: #{tpu_custom_call.1} parent=1 // pred_check
      _
    $region15: #{tpu_custom_call.1} parent=1 // pred_check_branch
      %32 = sbr.rel (0) target = $region17
    $region16: #{tpu_custom_call.1} parent=1 // pred_region
      %33 = dma.done [#allocation5], 16
    $region17: #{tpu_custom_call.1} parent=1 // pred_fallthru
      _
    // Predicated region
    $region18: #{tpu_custom_call.1} parent=1 // pred_check
      _
    $region19: #{tpu_custom_call.1} parent=1 // pred_check_branch
      %35 = sbr.rel (0) target = $region21
    $region20: #{tpu_custom_call.1} parent=1 // pred_region
      %36 = dma.done [#allocation3], 128
    $region21: #{tpu_custom_call.1} parent=1 // pred_fallthru
      _
    %37 = sfence
    %v38 = vld [vmem:[%s2] sm:$0x1]
    %s39 = sld [smem:[#allocation2]]
    %v40 = vld [vmem:[#allocation6] sm:$0x1]
    %v41 = vstv %s39
    %v42 = vmul.f32 %v41, %v40
    %v43 = vadd.f32 %v38, %v42
    %s44 = sld [smem:[#allocation2 + $0x1]]
    %v45 = vld [vmem:[#allocation6 + $0x1] sm:$0x1]
    %v46 = vstv %s44
    %v47 = vmul.f32 %v46, %v45
    %v48 = vadd.f32 %v43, %v47
    %s49 = sld [smem:[#allocation2 + $0x2]]
    %v50 = vld [vmem:[#allocation6 + $0x2] sm:$0x1]
    %v51 = vstv %s49
    %v52 = vmul.f32 %v51, %v50
    %v53 = vadd.f32 %v48, %v52
    %s54 = sld [smem:[#allocation2 + $0x3]]
    %v55 = vld [vmem:[#allocation6 + $0x3] sm:$0x1]
    %v56 = vstv %s54
    %v57 = vmul.f32 %v56, %v55
    %v58 = vadd.f32 %v53, %v57
    %s59 = sld [smem:[#allocation2 + $0x4]]
    %v60 = vld [vmem:[#allocation6 + $0x4] sm:$0x1]
    %v61 = vstv %s59
    %v62 = vmul.f32 %v61, %v60
    %v63 = vadd.f32 %v58, %v62
    %v64 = vmax.f32 %v63, 0.0
    %v65 = vmin.f32 %v64, 6.0
    %v66 = vmul.f32 %v63, %v65
    %v67 = vmul.f32 %v66, 0.16666667
    %v68 = vadd.f32 %v67, 0.5
    %vm69 = vcmask 57344
    %70 = vst.msk [vmem:[#allocation7] sm:$0x1] %vm69, %v68
    // Predicated region
    $region22: #{tpu_custom_call.1} parent=1 // pred_check
      _
    $region23: #{tpu_custom_call.1} parent=1 // pred_check_branch
      %72 = sbr.rel (0) target = $region25
    $region24: #{tpu_custom_call.1} parent=1 // pred_region
      %s74 = ssub.s32 16, 16
      %75 = vsyncadd [#allocation4], %s74
      %s77 = sshll.u32 [#allocation7], 4
      %s78 = int_to_ptr.vmem [resolvable:$true] %s77
      %80 = dma.vmem_to_hbm [thread:$0]  %s78, 16, %s3, [#allocation4]
    $region25: #{tpu_custom_call.1} parent=1 // pred_fallthru
      _
    // Predicated region
    $region26: #{tpu_custom_call.1} parent=1 // pred_check
      _
    $region27: #{tpu_custom_call.1} parent=1 // pred_check_branch
      %82 = sbr.rel (0) target = $region29
    $region28: #{tpu_custom_call.1} parent=1 // pred_region
      %83 = dma.done [#allocation4], 16
    $region29: #{tpu_custom_call.1} parent=1 // pred_fallthru
      _
    %84 = vsyncpa [#allocation3], 1
    %85 = vsyncpa [#allocation4], 1
    %86 = vsyncpa [#allocation5], 1

</llo_original>
